<compile_context>
chip_gen: v6e
topology: v6e:2x2x1
jax: 0.10.0
libtpu: 0.0.40
codegen_flags: <defaults>
</compile_context>

<pallas_src>
import math
import numpy as np
import jax
import jax.numpy as jnp
from jax.experimental import pallas as pl
from jax.experimental.pallas import tpu as pltpu


# --------------------------------------------------------------------------------------
# Kernel
# --------------------------------------------------------------------------------------
def _make_kernel(B, S, I, H, F, M, lanes):
    # bf16 weight-slab row offsets (all multiples of 16 -> bf16 tile aligned)
    R_WCAT = 0                    # (I, lanes)  fused [w_lin.T | q | k | v'' ] (out_proj folded)
    R_WPK = R_WCAT + I            # (H, lanes)  [fc1.T | mlp1.T]
    R_WFC2 = R_WPK + H            # (F, lanes)  fc2.T (first H lanes)
    # f32 slab row offsets
    R_BIAS = 0                    # (S, lanes)  per-position bias (batch independent)
    R_VEC = R_BIAS + S            # (12, lanes) small vectors, one per row
    NVEC = 12

    def kernel(x_ref, w_ref, f_ref, o_ref):
        x = x_ref[...]                                            # (N, I) bf16

        # --- fused input projection + attn in-projection + out-projection (one MXU pass)
        w_cat = w_ref[R_WCAT:R_WCAT + I, :]                       # (I, lanes) bf16
        fused = jnp.dot(x, w_cat, preferred_element_type=jnp.float32)   # (N, lanes) f32
        bias = f_ref[R_BIAS:R_BIAS + S, :]                        # (S, lanes) f32
        f3 = fused.reshape(B, S, lanes) + bias[None, :, :]        # broadcast over batch

        # lanes [0:H)=h, [H:2H)=q (pre-scaled by 1/sqrt(H)), [2H:3H)=k, [3H:4H)=v@Wo.T
        h_l = f3[:, S - 1, 0:H]                                   # (B, H)   last token only
        q_l = f3[:, S - 1:S, H:2 * H]                             # (B, 1, H)
        k = f3[:, :, 2 * H:3 * H]                                 # (B, S, H)
        v = f3[:, :, 3 * H:4 * H]                                 # (B, S, H) already out-projected

        # --- single-head attention, last query only (VPU mul + XLU reduces, f32) -------
        s = jnp.sum(q_l * k, axis=-1)                             # (B, S) scores
        s = s - jnp.max(s, axis=-1, keepdims=True)
        e = jnp.exp(s)
        pattn = e * pl.reciprocal(jnp.sum(e, axis=-1, keepdims=True), approx=True)
        attn = jnp.sum(pattn[:, :, None] * v, axis=1)             # (B, H) out-projected ctx

        # --- small vectors (one load) ---------------------------------------------------
        vecs = f_ref[R_VEC:R_VEC + NVEC, :]                       # (12, lanes)

        def vec(i, w):
            return vecs[i:i + 1, 0:w]                             # (1, w) broadcast row

        def ln(z, wrow, brow, eps=1e-5):                          # f32 LayerNorm
            mu = jnp.mean(z, axis=-1, keepdims=True)
            var = jnp.mean(jnp.square(z - mu), axis=-1, keepdims=True)
            return (z - mu) * jax.lax.rsqrt(var + eps) * wrow + brow

        # --- residual + LN1 (out_proj_b added explicitly, not folded through softmax) ---
        x1 = ln(h_l + attn + vec(0, H), vec(1, H), vec(2, H))

        # --- packed second-stage weights (bf16) ------------------------------------------
        w_fc1 = w_ref[R_WPK:R_WPK + H, 0:F]                       # (H, F)
        w_mlp1 = w_ref[R_WPK:R_WPK + H, F:F + M]                  # (H, M)
        w_fc2 = w_ref[R_WFC2:R_WFC2 + F, 0:H]                     # (F, H)

        # --- feed-forward block + LN2 (bf16 MXU operands, f32 accumulate/epilogue) -------
        f = jnp.maximum(
            jnp.dot(x1.astype(jnp.bfloat16), w_fc1,
                    preferred_element_type=jnp.float32) + vec(3, F), 0.0)
        y2 = jnp.dot(f.astype(jnp.bfloat16), w_fc2,
                     preferred_element_type=jnp.float32) + vec(4, H)
        x2 = ln(x1 + y2, vec(5, H), vec(6, H))

        # --- output MLP -------------------------------------------------------------------
        z = jnp.maximum(
            jnp.dot(x2.astype(jnp.bfloat16), w_mlp1,
                    preferred_element_type=jnp.float32) + vec(7, M), 0.0)
        z = ln(z, vec(8, M), vec(9, M))
        out = jnp.sum(z * vec(10, M), axis=-1, keepdims=True) + vec(11, 1)
        o_ref[...] = out.astype(o_ref.dtype)

    return kernel


# --------------------------------------------------------------------------------------
# Host-side parameter packing (one-time; batch independent)
# --------------------------------------------------------------------------------------
def pack_params(p):
    H, I = p['w_lin'].shape
    S = p['pos'].shape[1]
    F = p['fc1_w'].shape[0]
    M = p['mlp1_w'].shape[0]
    lanes = -(-max(4 * H, F + M, H) // 128) * 128
    scale = 1.0 / math.sqrt(H)

    w_lin = jnp.asarray(p['w_lin'], jnp.float32)
    in_w = jnp.asarray(p['in_proj_w'], jnp.float32)
    in_b = jnp.asarray(p['in_proj_b'], jnp.float32)
    Wq, Wk, Wv = in_w[:H], in_w[H:2 * H], in_w[2 * H:]
    bq, bk, bv = in_b[:H], in_b[H:2 * H], in_b[2 * H:]
    Wo = jnp.asarray(p['out_proj_w'], jnp.float32)

    def pad(a):
        a = jnp.asarray(a, jnp.float32)
        return jnp.pad(a, ((0, 0), (0, lanes - a.shape[1])))

    # fused weight: x @ w_cat -> [h | q*scale | k | v@Wo.T]  (out_proj folded into v)
    w_cat = jnp.concatenate([
        w_lin.T,
        (Wq @ w_lin).T * scale,
        (Wk @ w_lin).T,
        (Wo @ Wv @ w_lin).T,
    ], axis=1)                                                            # (I, 4H)

    # per-position bias block (pos + b_lin folded through in-proj / out-proj), batch free
    hb = jnp.asarray(p['pos'], jnp.float32)[0] + jnp.asarray(p['b_lin'], jnp.float32)[None, :]
    bias_cat = jnp.concatenate([
        hb,
        (hb @ Wq.T + bq[None, :]) * scale,
        hb @ Wk.T + bk[None, :],
        (hb @ Wv.T + bv[None, :]) @ Wo.T,
    ], axis=1)                                                            # (S, 4H)

    # second-stage weights, pre-transposed to (in, out) and lane-packed
    w_pack = jnp.concatenate([p['fc1_w'].T, p['mlp1_w'].T], axis=1)       # (H, F+M)
    w_fc2 = p['fc2_w'].T                                                  # (F, H)

    # bf16 weight slab: only MXU operands; rows 0..I | I..I+H | I+H..I+H+F
    w_slab = jnp.concatenate([pad(w_cat), pad(w_pack), pad(w_fc2)],
                             axis=0).astype(jnp.bfloat16)

    def row(v):
        return pad(jnp.asarray(v, jnp.float32).reshape(1, -1))

    vec_rows = jnp.concatenate([row(p[k]) for k in
        ('out_proj_b', 'norm1_w', 'norm1_b', 'fc1_b', 'fc2_b', 'norm2_w',
         'norm2_b', 'mlp1_b', 'mlp_ln_w', 'mlp_ln_b', 'mlp2_w', 'mlp2_b')], axis=0)

    # f32 slab: bias block + small vectors (LN / bias / residual path stays f32)
    f_slab = jnp.concatenate([pad(bias_cat), vec_rows], axis=0)           # (S+12, lanes)
    return w_slab, f_slab


def bert_ft_pallas(x, w_slab, f_slab, *, num_hidden, ffn_hidden, mlp_size):
    B, S, I = x.shape
    H, F, M = num_hidden, ffn_hidden, mlp_size
    lanes = w_slab.shape[1]
    x2d = x.reshape(B * S, I).astype(jnp.bfloat16)
    kernel = _make_kernel(B, S, I, H, F, M, lanes)
    vmem = pl.BlockSpec(memory_space=pltpu.MemorySpace.VMEM)
    # TODO(synk): at production batch sizes, block the B*S row dim with a grid
    # (grid=(pl.cdiv(B*S, 256),)) + dimension_semantics=("parallel",) so both v7x
    # TensorCores are used; gridless is optimal at these toy shapes.
    return pl.pallas_call(
        kernel,
        out_shape=jax.ShapeDtypeStruct((B, 1), jnp.float32),
        in_specs=[vmem, vmem, vmem],
        out_specs=vmem,
    )(x2d, w_slab, f_slab)


# --------------------------------------------------------------------------------------
# Parameter init + plain-JAX reference (mirrors the PyTorch forward, eval mode)
# --------------------------------------------------------------------------------------
def init_params(key, input_size, num_hidden, seq_len, ffn_hidden, mlp_size):
    ks = jax.random.split(key, 12)
    def w(k, shape, scale=0.1):
        return (scale * jax.random.normal(k, shape)).astype(jnp.float32)
    return dict(
        pos=w(ks[0], (1, seq_len, num_hidden)),
        w_lin=w(ks[1], (num_hidden, input_size)),
        b_lin=w(ks[2], (num_hidden,)),
        in_proj_w=w(ks[3], (3 * num_hidden, num_hidden)),
        in_proj_b=w(ks[4], (3 * num_hidden,)),
        out_proj_w=w(ks[5], (num_hidden, num_hidden)),
        out_proj_b=jnp.zeros((num_hidden,), jnp.float32),
        norm1_w=jnp.ones((num_hidden,), jnp.float32),
        norm1_b=jnp.zeros((num_hidden,), jnp.float32),
        fc1_w=w(ks[6], (ffn_hidden, num_hidden)),
        fc1_b=w(ks[7], (ffn_hidden,)),
        fc2_w=w(ks[8], (num_hidden, ffn_hidden)),
        fc2_b=w(ks[9], (num_hidden,)),
        norm2_w=jnp.ones((num_hidden,), jnp.float32),
        norm2_b=jnp.zeros((num_hidden,), jnp.float32),
        mlp1_w=w(ks[10], (mlp_size, num_hidden)),
        mlp1_b=jnp.zeros((mlp_size,), jnp.float32),
        mlp_ln_w=jnp.ones((mlp_size,), jnp.float32),
        mlp_ln_b=jnp.zeros((mlp_size,), jnp.float32),
        mlp2_w=w(ks[11], (1, mlp_size)),
        mlp2_b=jnp.zeros((1,), jnp.float32),
    )


def bert_ft_ref(x, p):
    H = p['w_lin'].shape[0]
    h = x @ p['w_lin'].T + p['b_lin'] + p['pos']
    qkv = h @ p['in_proj_w'].T + p['in_proj_b']
    q = qkv[..., :H] / math.sqrt(H)
    k = qkv[..., H:2 * H]
    v = qkv[..., 2 * H:]
    a = jax.nn.softmax(jnp.einsum('bqh,bkh->bqk', q, k), axis=-1)
    y = jnp.einsum('bqk,bkh->bqh', a, v) @ p['out_proj_w'].T + p['out_proj_b']
    def ln(z, w, b):
        mu = z.mean(-1, keepdims=True)
        var = ((z - mu) ** 2).mean(-1, keepdims=True)
        return (z - mu) / jnp.sqrt(var + 1e-5) * w + b
    x1 = ln(h + y, p['norm1_w'], p['norm1_b'])
    y2 = jnp.maximum(x1 @ p['fc1_w'].T + p['fc1_b'], 0.0) @ p['fc2_w'].T + p['fc2_b']
    x2 = ln(x1 + y2, p['norm2_w'], p['norm2_b'])
    last = x2[:, -1, :]
    z = jnp.maximum(last @ p['mlp1_w'].T + p['mlp1_b'], 0.0)
    z = ln(z, p['mlp_ln_w'], p['mlp_ln_b'])
    return z @ p['mlp2_w'].T + p['mlp2_b']


if __name__ == "__main__":
    # batch=2, seq=8, input_size=16, num_hidden=32, ffn_hidden=64, mlp_size=32
    B, S, I, H, F, M = 2, 8, 16, 32, 64, 32
    key = jax.random.PRNGKey(0)
    kx, kp = jax.random.split(key)
    x = jax.random.normal(kx, (B, S, I), dtype=jnp.float32)
    params = init_params(kp, I, H, S, F, M)

    w_slab, f_slab = pack_params(params)
    out = jax.block_until_ready(
        bert_ft_pallas(x, w_slab, f_slab, num_hidden=H, ffn_hidden=F, mlp_size=M))
    ref = bert_ft_ref(x, params)
    # tolerance accounts for bf16 MXU operands (weights + activations at the dots)
    # and the EUP approximate reciprocal in the softmax denominator; LN/softmax/
    # residual math stays f32, so errors remain at the ~1e-2 level vs. the f32 ref.
    np.testing.assert_allclose(np.asarray(out), np.asarray(ref), rtol=3e-2, atol=3e-2)
    assert out.shape == (B, 1)
    print("KERNEL_OK")
</pallas_src>

<mosaic_0001>
module attributes {stable_mosaic.version = 11 : i64} {
  func.func @kernel(%arg0: memref<16x16xbf16, #tpu.memory_space<vmem>>, %arg1: memref<112x128xbf16, #tpu.memory_space<vmem>>, %arg2: memref<20x128xf32, #tpu.memory_space<vmem>>, %arg3: memref<2x1xf32, #tpu.memory_space<vmem>>) attributes {dimension_semantics = [], scalar_prefetch = 0 : i64, scratch_operands = 0 : i64, tpu.core_type = #tpu.core_type<tc>} {
    %c0 = arith.constant 0 : index
    %c0_0 = arith.constant 0 : index
    %0 = vector.load %arg0[%c0, %c0_0] : memref<16x16xbf16, #tpu.memory_space<vmem>>, vector<16x16xbf16>
    %c0_1 = arith.constant 0 : index
    %c0_2 = arith.constant 0 : index
    %1 = vector.load %arg1[%c0_1, %c0_2] : memref<112x128xbf16, #tpu.memory_space<vmem>>, vector<16x128xbf16>
    %cst = arith.constant dense<0.000000e+00> : vector<16x128xf32>
    %2 = tpu.matmul %0, %1, %cst {dimension_numbers = #tpu.dot_dimension_numbers<[1], [0], [0], [1], [0, 0, 1, 1], [], []>} : vector<16x16xbf16>, vector<16x128xbf16>, vector<16x128xf32> -> vector<16x128xf32>
    %c0_3 = arith.constant 0 : index
    %c0_4 = arith.constant 0 : index
    %3 = vector.load %arg2[%c0_3, %c0_4] : memref<20x128xf32, #tpu.memory_space<vmem>>, vector<8x128xf32>
    %4 = vector.shape_cast %2 : vector<16x128xf32> to vector<2x8x128xf32>
    %5 = vector.shape_cast %3 : vector<8x128xf32> to vector<1x8x128xf32>
    %6 = vector.broadcast %5 : vector<1x8x128xf32> to vector<2x8x128xf32>
    %7 = arith.addf %4, %6 : vector<2x8x128xf32>
    %8 = vector.extract_strided_slice %7 {offsets = [0, 7, 0], sizes = [2, 1, 32], strides = [1, 1, 1]} : vector<2x8x128xf32> to vector<2x1x32xf32>
    %9 = vector.shape_cast %8 : vector<2x1x32xf32> to vector<2x32xf32>
    %10 = vector.extract_strided_slice %7 {offsets = [0, 7, 32], sizes = [2, 1, 32], strides = [1, 1, 1]} : vector<2x8x128xf32> to vector<2x1x32xf32>
    %11 = vector.extract_strided_slice %7 {offsets = [0, 0, 64], sizes = [2, 8, 32], strides = [1, 1, 1]} : vector<2x8x128xf32> to vector<2x8x32xf32>
    %12 = vector.extract_strided_slice %7 {offsets = [0, 0, 96], sizes = [2, 8, 32], strides = [1, 1, 1]} : vector<2x8x128xf32> to vector<2x8x32xf32>
    %13 = vector.broadcast %10 : vector<2x1x32xf32> to vector<2x8x32xf32>
    %14 = arith.mulf %13, %11 : vector<2x8x32xf32>
    %cst_5 = arith.constant dense<0.000000e+00> : vector<2x8xf32>
    %15 = vector.multi_reduction <add>, %14, %cst_5 [2] : vector<2x8x32xf32> to vector<2x8xf32>
    %cst_6 = arith.constant dense<0xFF800000> : vector<2xf32>
    %16 = vector.multi_reduction <maximumf>, %15, %cst_6 [1] : vector<2x8xf32> to vector<2xf32>
    %17 = vector.shape_cast %16 : vector<2xf32> to vector<2x1xf32>
    %18 = vector.broadcast %17 : vector<2x1xf32> to vector<2x8xf32>
    %19 = arith.subf %15, %18 : vector<2x8xf32>
    %20 = math.exp %19 : vector<2x8xf32>
    %cst_7 = arith.constant dense<0.000000e+00> : vector<2xf32>
    %21 = vector.multi_reduction <add>, %20, %cst_7 [1] : vector<2x8xf32> to vector<2xf32>
    %22 = vector.shape_cast %21 : vector<2xf32> to vector<2x1xf32>
    %23 = tpu.reciprocal %22 {approx = true} : vector<2x1xf32> -> vector<2x1xf32>
    %24 = vector.broadcast %23 : vector<2x1xf32> to vector<2x8xf32>
    %25 = arith.mulf %20, %24 : vector<2x8xf32>
    %26 = vector.shape_cast %25 : vector<2x8xf32> to vector<2x8x1xf32>
    %27 = vector.broadcast %26 : vector<2x8x1xf32> to vector<2x8x32xf32>
    %28 = arith.mulf %27, %12 : vector<2x8x32xf32>
    %cst_8 = arith.constant dense<0.000000e+00> : vector<2x32xf32>
    %29 = vector.multi_reduction <add>, %28, %cst_8 [1] : vector<2x8x32xf32> to vector<2x32xf32>
    %c8 = arith.constant 8 : index
    %c0_9 = arith.constant 0 : index
    %30 = vector.load %arg2[%c8, %c0_9] : memref<20x128xf32, #tpu.memory_space<vmem>>, vector<12x128xf32>
    %31 = arith.addf %9, %29 : vector<2x32xf32>
    %32 = vector.extract_strided_slice %30 {offsets = [0, 0], sizes = [1, 32], strides = [1, 1]} : vector<12x128xf32> to vector<1x32xf32>
    %33 = vector.broadcast %32 : vector<1x32xf32> to vector<2x32xf32>
    %34 = arith.addf %31, %33 : vector<2x32xf32>
    %35 = vector.extract_strided_slice %30 {offsets = [1, 0], sizes = [1, 32], strides = [1, 1]} : vector<12x128xf32> to vector<1x32xf32>
    %36 = vector.extract_strided_slice %30 {offsets = [2, 0], sizes = [1, 32], strides = [1, 1]} : vector<12x128xf32> to vector<1x32xf32>
    %cst_10 = arith.constant dense<0.000000e+00> : vector<2xf32>
    %37 = vector.multi_reduction <add>, %34, %cst_10 [1] : vector<2x32xf32> to vector<2xf32>
    %38 = vector.shape_cast %37 : vector<2xf32> to vector<2x1xf32>
    %cst_11 = arith.constant 3.200000e+01 : f32
    %39 = vector.broadcast %cst_11 : f32 to vector<2x1xf32>
    %40 = arith.divf %38, %39 : vector<2x1xf32>
    %41 = vector.broadcast %40 : vector<2x1xf32> to vector<2x32xf32>
    %42 = arith.subf %34, %41 : vector<2x32xf32>
    %43 = arith.mulf %42, %42 : vector<2x32xf32>
    %cst_12 = arith.constant dense<0.000000e+00> : vector<2xf32>
    %44 = vector.multi_reduction <add>, %43, %cst_12 [1] : vector<2x32xf32> to vector<2xf32>
    %45 = vector.shape_cast %44 : vector<2xf32> to vector<2x1xf32>
    %cst_13 = arith.constant 3.200000e+01 : f32
    %46 = vector.broadcast %cst_13 : f32 to vector<2x1xf32>
    %47 = arith.divf %45, %46 : vector<2x1xf32>
    %48 = vector.broadcast %40 : vector<2x1xf32> to vector<2x32xf32>
    %49 = arith.subf %34, %48 : vector<2x32xf32>
    %cst_14 = arith.constant 9.99999974E-6 : f32
    %50 = vector.broadcast %cst_14 : f32 to vector<2x1xf32>
    %51 = arith.addf %47, %50 : vector<2x1xf32>
    %52 = math.rsqrt %51 : vector<2x1xf32>
    %53 = vector.broadcast %52 : vector<2x1xf32> to vector<2x32xf32>
    %54 = arith.mulf %49, %53 : vector<2x32xf32>
    %55 = vector.broadcast %35 : vector<1x32xf32> to vector<2x32xf32>
    %56 = arith.mulf %54, %55 : vector<2x32xf32>
    %57 = vector.broadcast %36 : vector<1x32xf32> to vector<2x32xf32>
    %58 = arith.addf %56, %57 : vector<2x32xf32>
    %c16 = arith.constant 16 : index
    %c0_15 = arith.constant 0 : index
    %59 = vector.load %arg1[%c16, %c0_15] : memref<112x128xbf16, #tpu.memory_space<vmem>>, vector<32x64xbf16>
    %c16_16 = arith.constant 16 : index
    %c64 = arith.constant 64 : index
    %60 = vector.load %arg1[%c16_16, %c64] : memref<112x128xbf16, #tpu.memory_space<vmem>>, vector<32x32xbf16>
    %c48 = arith.constant 48 : index
    %c0_17 = arith.constant 0 : index
    %61 = vector.load %arg1[%c48, %c0_17] : memref<112x128xbf16, #tpu.memory_space<vmem>>, vector<64x32xbf16>
    %62 = arith.truncf %58 : vector<2x32xf32> to vector<2x32xbf16>
    %cst_18 = arith.constant dense<0.000000e+00> : vector<2x64xf32>
    %63 = tpu.matmul %62, %59, %cst_18 {dimension_numbers = #tpu.dot_dimension_numbers<[1], [0], [0], [1], [0, 0, 1, 1], [], []>} : vector<2x32xbf16>, vector<32x64xbf16>, vector<2x64xf32> -> vector<2x64xf32>
    %64 = vector.extract_strided_slice %30 {offsets = [3, 0], sizes = [1, 64], strides = [1, 1]} : vector<12x128xf32> to vector<1x64xf32>
    %65 = vector.broadcast %64 : vector<1x64xf32> to vector<2x64xf32>
    %66 = arith.addf %63, %65 : vector<2x64xf32>
    %cst_19 = arith.constant 0.000000e+00 : f32
    %67 = vector.broadcast %cst_19 : f32 to vector<2x64xf32>
    %68 = arith.maximumf %66, %67 : vector<2x64xf32>
    %69 = arith.truncf %68 : vector<2x64xf32> to vector<2x64xbf16>
    %cst_20 = arith.constant dense<0.000000e+00> : vector<2x32xf32>
    %70 = tpu.matmul %69, %61, %cst_20 {dimension_numbers = #tpu.dot_dimension_numbers<[1], [0], [0], [1], [0, 0, 1, 1], [], []>} : vector<2x64xbf16>, vector<64x32xbf16>, vector<2x32xf32> -> vector<2x32xf32>
    %71 = vector.extract_strided_slice %30 {offsets = [4, 0], sizes = [1, 32], strides = [1, 1]} : vector<12x128xf32> to vector<1x32xf32>
    %72 = vector.broadcast %71 : vector<1x32xf32> to vector<2x32xf32>
    %73 = arith.addf %70, %72 : vector<2x32xf32>
    %74 = arith.addf %58, %73 : vector<2x32xf32>
    %75 = vector.extract_strided_slice %30 {offsets = [5, 0], sizes = [1, 32], strides = [1, 1]} : vector<12x128xf32> to vector<1x32xf32>
    %76 = vector.extract_strided_slice %30 {offsets = [6, 0], sizes = [1, 32], strides = [1, 1]} : vector<12x128xf32> to vector<1x32xf32>
    %cst_21 = arith.constant dense<0.000000e+00> : vector<2xf32>
    %77 = vector.multi_reduction <add>, %74, %cst_21 [1] : vector<2x32xf32> to vector<2xf32>
    %78 = vector.shape_cast %77 : vector<2xf32> to vector<2x1xf32>
    %cst_22 = arith.constant 3.200000e+01 : f32
    %79 = vector.broadcast %cst_22 : f32 to vector<2x1xf32>
    %80 = arith.divf %78, %79 : vector<2x1xf32>
    %81 = vector.broadcast %80 : vector<2x1xf32> to vector<2x32xf32>
    %82 = arith.subf %74, %81 : vector<2x32xf32>
    %83 = arith.mulf %82, %82 : vector<2x32xf32>
    %cst_23 = arith.constant dense<0.000000e+00> : vector<2xf32>
    %84 = vector.multi_reduction <add>, %83, %cst_23 [1] : vector<2x32xf32> to vector<2xf32>
    %85 = vector.shape_cast %84 : vector<2xf32> to vector<2x1xf32>
    %cst_24 = arith.constant 3.200000e+01 : f32
    %86 = vector.broadcast %cst_24 : f32 to vector<2x1xf32>
    %87 = arith.divf %85, %86 : vector<2x1xf32>
    %88 = vector.broadcast %80 : vector<2x1xf32> to vector<2x32xf32>
    %89 = arith.subf %74, %88 : vector<2x32xf32>
    %cst_25 = arith.constant 9.99999974E-6 : f32
    %90 = vector.broadcast %cst_25 : f32 to vector<2x1xf32>
    %91 = arith.addf %87, %90 : vector<2x1xf32>
    %92 = math.rsqrt %91 : vector<2x1xf32>
    %93 = vector.broadcast %92 : vector<2x1xf32> to vector<2x32xf32>
    %94 = arith.mulf %89, %93 : vector<2x32xf32>
    %95 = vector.broadcast %75 : vector<1x32xf32> to vector<2x32xf32>
    %96 = arith.mulf %94, %95 : vector<2x32xf32>
    %97 = vector.broadcast %76 : vector<1x32xf32> to vector<2x32xf32>
    %98 = arith.addf %96, %97 : vector<2x32xf32>
    %99 = arith.truncf %98 : vector<2x32xf32> to vector<2x32xbf16>
    %cst_26 = arith.constant dense<0.000000e+00> : vector<2x32xf32>
    %100 = tpu.matmul %99, %60, %cst_26 {dimension_numbers = #tpu.dot_dimension_numbers<[1], [0], [0], [1], [0, 0, 1, 1], [], []>} : vector<2x32xbf16>, vector<32x32xbf16>, vector<2x32xf32> -> vector<2x32xf32>
    %101 = vector.extract_strided_slice %30 {offsets = [7, 0], sizes = [1, 32], strides = [1, 1]} : vector<12x128xf32> to vector<1x32xf32>
    %102 = vector.broadcast %101 : vector<1x32xf32> to vector<2x32xf32>
    %103 = arith.addf %100, %102 : vector<2x32xf32>
    %cst_27 = arith.constant 0.000000e+00 : f32
    %104 = vector.broadcast %cst_27 : f32 to vector<2x32xf32>
    %105 = arith.maximumf %103, %104 : vector<2x32xf32>
    %106 = vector.extract_strided_slice %30 {offsets = [8, 0], sizes = [1, 32], strides = [1, 1]} : vector<12x128xf32> to vector<1x32xf32>
    %107 = vector.extract_strided_slice %30 {offsets = [9, 0], sizes = [1, 32], strides = [1, 1]} : vector<12x128xf32> to vector<1x32xf32>
    %cst_28 = arith.constant dense<0.000000e+00> : vector<2xf32>
    %108 = vector.multi_reduction <add>, %105, %cst_28 [1] : vector<2x32xf32> to vector<2xf32>
    %109 = vector.shape_cast %108 : vector<2xf32> to vector<2x1xf32>
    %cst_29 = arith.constant 3.200000e+01 : f32
    %110 = vector.broadcast %cst_29 : f32 to vector<2x1xf32>
    %111 = arith.divf %109, %110 : vector<2x1xf32>
    %112 = vector.broadcast %111 : vector<2x1xf32> to vector<2x32xf32>
    %113 = arith.subf %105, %112 : vector<2x32xf32>
    %114 = arith.mulf %113, %113 : vector<2x32xf32>
    %cst_30 = arith.constant dense<0.000000e+00> : vector<2xf32>
    %115 = vector.multi_reduction <add>, %114, %cst_30 [1] : vector<2x32xf32> to vector<2xf32>
    %116 = vector.shape_cast %115 : vector<2xf32> to vector<2x1xf32>
    %cst_31 = arith.constant 3.200000e+01 : f32
    %117 = vector.broadcast %cst_31 : f32 to vector<2x1xf32>
    %118 = arith.divf %116, %117 : vector<2x1xf32>
    %119 = vector.broadcast %111 : vector<2x1xf32> to vector<2x32xf32>
    %120 = arith.subf %105, %119 : vector<2x32xf32>
    %cst_32 = arith.constant 9.99999974E-6 : f32
    %121 = vector.broadcast %cst_32 : f32 to vector<2x1xf32>
    %122 = arith.addf %118, %121 : vector<2x1xf32>
    %123 = math.rsqrt %122 : vector<2x1xf32>
    %124 = vector.broadcast %123 : vector<2x1xf32> to vector<2x32xf32>
    %125 = arith.mulf %120, %124 : vector<2x32xf32>
    %126 = vector.broadcast %106 : vector<1x32xf32> to vector<2x32xf32>
    %127 = arith.mulf %125, %126 : vector<2x32xf32>
    %128 = vector.broadcast %107 : vector<1x32xf32> to vector<2x32xf32>
    %129 = arith.addf %127, %128 : vector<2x32xf32>
    %130 = vector.extract_strided_slice %30 {offsets = [10, 0], sizes = [1, 32], strides = [1, 1]} : vector<12x128xf32> to vector<1x32xf32>
    %131 = vector.broadcast %130 : vector<1x32xf32> to vector<2x32xf32>
    %132 = arith.mulf %129, %131 : vector<2x32xf32>
    %cst_33 = arith.constant dense<0.000000e+00> : vector<2xf32>
    %133 = vector.multi_reduction <add>, %132, %cst_33 [1] : vector<2x32xf32> to vector<2xf32>
    %134 = vector.shape_cast %133 : vector<2xf32> to vector<2x1xf32>
    %135 = vector.extract_strided_slice %30 {offsets = [11, 0], sizes = [1, 1], strides = [1, 1]} : vector<12x128xf32> to vector<1x1xf32>
    %136 = vector.broadcast %135 : vector<1x1xf32> to vector<2x1xf32>
    %137 = arith.addf %134, %136 : vector<2x1xf32>
    %c0_34 = arith.constant 0 : index
    %c0_35 = arith.constant 0 : index
    %138 = vector.load %arg3[%c0_34, %c0_35] : memref<2x1xf32, #tpu.memory_space<vmem>>, vector<2x1xf32>
    tpu.vector_store %arg3[%c0_34, %c0_35], %137 {strides = array<i32>} : memref<2x1xf32, #tpu.memory_space<vmem>>, vector<2x1xf32>,
    return
  }
}

</mosaic_0001>

<llo_original>
// kernel: tpu_custom_call.1
$region0: #{tpu_custom_call.1}
  #allocation0 [shape = 'u32[]', space=smem, size = 0x4, offset = 0x4, fixed_abs, tag = 'smem constant byte address 0x4 - core index']
  #allocation1 [shape = 'u32[144,128]{1,0:T(1,128)}', space=vmem, size = 0x12000, scoped, tag = 'internal scratch']
  %s0 = inlined_call_operand.hbm [shape: bf16[16,16], index: 0, kind: input, shape index: {}]
  %s1 = inlined_call_operand.hbm [shape: bf16[112,128], index: 1, kind: input, shape index: {}]
  %s2 = inlined_call_operand.hbm [shape: f32[20,128], index: 2, kind: input, shape index: {}]
  %s3 = inlined_call_operand.vmem [shape: f32[2,1], index: 3, kind: output, shape index: {}]
  %s4 = sld [smem:[#allocation0]]
  $region34: #{tpu_custom_call.1} parent=0
    _
  %s6 = ssub.s32 1, %s4
  %s7 = scalar_select 0, %s6, %s4
  $region1: #{tpu_custom_call.1} parent=0
    #allocation2 [shape = 'u8[4096]{0}', space=vmem, size = 0x1000, scoped, tag = 'input window, operand 0, single buffered']
    #allocation3 [shape = 's32[1]{0}', space=sflag, size = 0x4, scoped, tag = 'scoped memory for tpu_custom_call.1']
    #allocation4 [shape = 'u8[28672]{0}', space=vmem, size = 0x7000, scoped, tag = 'input window, operand 1, single buffered']
    #allocation5 [shape = 's32[1]{0}', space=sflag, size = 0x4, scoped, tag = 'scoped memory for tpu_custom_call.1']
    #allocation6 [shape = 'u8[12288]{0}', space=vmem, size = 0x3000, scoped, tag = 'input window, operand 2, single buffered']
    %8 = vsyncpa [#allocation3], 0
    %9 = vsyncpa [#allocation5], 0
    // Predicated region
    $region2: #{tpu_custom_call.1} parent=1 // pred_check
      _
    $region3: #{tpu_custom_call.1} parent=1 // pred_check_branch
      %11 = sbr.rel (0) target = $region5
    $region4: #{tpu_custom_call.1} parent=1 // pred_region
      %s13 = ssub.s32 128, 128
      %14 = vsyncadd [#allocation3], %s13
      %s15 = sshll.u32 [#allocation2], 4
      %s16 = int_to_ptr.vmem [resolvable:$true] %s15
      %21 = dma.hbm_to_vmem [thread:$0]  %s0, 128, %s16, [#allocation3], 64, 64, 4
    $region5: #{tpu_custom_call.1} parent=1 // pred_fallthru
      _
    // Predicated region
    $region6: #{tpu_custom_call.1} parent=1 // pred_check
      _
    $region7: #{tpu_custom_call.1} parent=1 // pred_check_branch
      %23 = sbr.rel (0) target = $region9
    $region8: #{tpu_custom_call.1} parent=1 // pred_region
      %s25 = ssub.s32 896, 896
      %26 = vsyncadd [#allocation5], %s25
      %s27 = sshll.u32 [#allocation4], 4
      %s28 = int_to_ptr.vmem [resolvable:$true] %s27
      %33 = dma.hbm_to_vmem [thread:$0]  %s1, 896, %s28, [#allocation5], 64, 64, 4
    $region9: #{tpu_custom_call.1} parent=1 // pred_fallthru
      _
    // Predicated region
    $region10: #{tpu_custom_call.1} parent=1 // pred_check
      _
    $region11: #{tpu_custom_call.1} parent=1 // pred_check_branch
      %35 = sbr.rel (0) target = $region13
    $region12: #{tpu_custom_call.1} parent=1 // pred_region
      %s37 = ssub.s32 384, 384
      %38 = vsyncadd [#allocation5], %s37
      %s39 = sshll.u32 [#allocation6], 4
      %s40 = int_to_ptr.vmem [resolvable:$true] %s39
      %45 = dma.hbm_to_vmem [thread:$0]  %s2, 384, %s40, [#allocation5], 128, 128, 8
    $region13: #{tpu_custom_call.1} parent=1 // pred_fallthru
      _
    // Predicated region
    $region14: #{tpu_custom_call.1} parent=1 // pred_check
      _
    $region15: #{tpu_custom_call.1} parent=1 // pred_check_branch
      %47 = sbr.rel (0) target = $region17
    $region16: #{tpu_custom_call.1} parent=1 // pred_region
      %48 = dma.done [#allocation3], 128
    $region17: #{tpu_custom_call.1} parent=1 // pred_fallthru
      _
    // Predicated region
    $region18: #{tpu_custom_call.1} parent=1 // pred_check
      _
    $region19: #{tpu_custom_call.1} parent=1 // pred_check_branch
      %50 = sbr.rel (0) target = $region21
    $region20: #{tpu_custom_call.1} parent=1 // pred_region
      %51 = dma.done [#allocation5], 896
    $region21: #{tpu_custom_call.1} parent=1 // pred_fallthru
      _
    // Predicated region
    $region22: #{tpu_custom_call.1} parent=1 // pred_check
      _
    $region23: #{tpu_custom_call.1} parent=1 // pred_check_branch
      %53 = sbr.rel (0) target = $region25
    $region24: #{tpu_custom_call.1} parent=1 // pred_region
      %54 = dma.done [#allocation5], 384
    $region25: #{tpu_custom_call.1} parent=1 // pred_fallthru
      _
    %v56 = vld [vmem:[#allocation2] sm:$0xf]
    %v57 = vld [vmem:[#allocation2 + $0x4] sm:$0xf]
    %v58 = vld [vmem:[#allocation4] sm:$0xf]
    %v59 = vld [vmem:[#allocation4 + $0x4] sm:$0xf]
    %v62 = vunpack.c.l.b16 %v56
    %v63 = vunpack.c.l.b16 %v57
    %v64 = vpack.c.b16 %v63, %v62
    %v67 = vunpack.c.l.b16 %v58
    %v68 = vunpack.c.l.b16 %v59
    %v69 = vpack.c.b16 %v68, %v67
    %vm71 = vcmask 130048
    %v73 = vsel %vm71, %v64, 0
    %75 = vmatprep.subr.bf16.mxu0 0
    %76 = vmatpush1.bf16.msra.mxu0 0
    %77 = vmatprep.subr.bf16.mxu0 0
    %78 = vmatpush1.bf16.msra.mxu0 0
    %79 = vmatprep.subr.bf16.mxu0 0
    %80 = vmatpush1.bf16.msra.mxu0 0
    %81 = vmatprep.subr.bf16.mxu0 0
    %82 = vmatpush1.bf16.msra.mxu0 0
    %83 = vmatprep.subr.bf16.mxu0 0
    %84 = vmatpush1.bf16.msra.mxu0 0
    %85 = vmatprep.subr.bf16.mxu0 0
    %86 = vmatpush1.bf16.msra.mxu0 0
    %87 = vmatprep.subr.bf16.mxu0 0
    %88 = vmatpush1.bf16.msra.mxu0 0
    %89 = vmatprep.subr.bf16.mxu0 0
    %90 = vmatpush1.bf16.msra.mxu0 %v69
    %91 = vmatprep.subr.bf16.mxu0 0
    %92 = vmatpush2.bf16.msra.mxu0 0
    %93 = vmatprep.subr.bf16.mxu0 0
    %94 = vmatpush2.bf16.msra.mxu0 0
    %95 = vmatprep.subr.bf16.mxu0 0
    %96 = vmatpush2.bf16.msra.mxu0 0
    %97 = vmatprep.subr.bf16.mxu0 0
    %98 = vmatpush2.bf16.msra.mxu0 0
    %99 = vmatprep.subr.bf16.mxu0 0
    %100 = vmatpush2.bf16.msra.mxu0 0
    %101 = vmatprep.subr.bf16.mxu0 0
    %102 = vmatpush2.bf16.msra.mxu0 0
    %103 = vmatprep.subr.bf16.mxu0 0
    %104 = vmatpush2.bf16.msra.mxu0 0
    %105 = vmatprep.subr.bf16.mxu0 0
    %106 = vmatpush2.bf16.msra.mxu0 0
    %107 = vmatprep.mubr.bf16.mxu0 0
    %108 = vmatmul.mubr.bf16.gmra.mxu0 %v73
    %v109 = vpop.f32.mrf.mxu0
    %v110 = vadd.f32 0.0, %v109
    %v111 = vpop.f32.mrf.mxu0
    %v112 = vpop.f32.mrf.mxu0
    %v113 = vadd.f32 0.0, %v112
    %v114 = vpop.f32.mrf.mxu0
    %115 = vdwg.mxu0
    %v116 = vld [vmem:[#allocation6] sm:$0xff]
    %v117 = vadd.f32 %v110, %v116
    %v118 = vadd.f32 %v113, %v116
    %v119 = vlaneseq
    %v120 = vshrl.u32 %v119, 7
    %v121 = vsub.s32 7, %v120
    %v122 = vrot.slane %v117, %v121
    %v123 = vlaneseq
    %v124 = vshrl.u32 %v123, 7
    %v125 = vsub.s32 7, %v124
    %v126 = vrot.slane %v118, %v125
    %129 = vrot.lane.b32.xlu0 %v117, 96
    %v130 = vpop.permute.xlu0 %129
    %131 = vrot.lane.b32.xlu0 %v118, 96
    %v132 = vpop.permute.xlu0 %131
    %v135 = vmul.f32 %v122, %v130
    %v136 = vmul.f32 %v126, %v132
    %139 = vrot.lane.b32.xlu0 %v135, 96
    %v140 = vpop.permute.xlu0 %139
    %141 = vrot.lane.b32.xlu0 %v136, 96
    %v142 = vpop.permute.xlu0 %141
    %vm145 = vcmask 261120
    %v146 = vsel %vm145, %v140, 0.0
    %147 = vadd.xlane.f32.xlu0 %v146
    %v148 = vpop.xlane.xlu0 %147
    %v149 = vsel %vm145, %v142, 0.0
    %150 = vadd.xlane.f32.xlu0 %v149
    %v151 = vpop.xlane.xlu0 %150
    %v154 = vlaneseq
    %v155 = vand.u32 %v154, 127
    %v156 = vlaneseq
    %v157 = vshrl.u32 %v156, 7
    %v158 = vsub.s32 %v155, %v157
    %v159 = vrot.slane %v148, %v158
    %v160 = vlaneseq
    %v161 = vshrl.u32 %v160, 7
    %v162 = vsub.s32 %v155, %v161
    %v163 = vrot.slane %v151, %v162
    %vm164 = vcmask 1041409
    %v165 = vsel %vm164, %v163, %v159
    %vm167 = vcmask 58368
    %v168 = vsel %vm167, %v165, -inf
    %169 = vmax.xlane.f32.xlu0 %v168
    %v170 = vpop.xlane.xlu0 %169
    %v172 = vlaneseq
    %v173 = vshrl.u32 %v172, 7
    %v174 = vsub.s32 0, %v173
    %v175 = vrot.slane %v170, %v174
    %v176 = vlaneseq
    %v177 = vshrl.u32 %v176, 7
    %v178 = vsub.s32 1, %v177
    %v179 = vrot.slane %v170, %v178
    %v182 = vsub.f32 %v148, %v175
    %v183 = vsub.f32 %v151, %v179
    %v184 = vmul.f32 %v182, 1.442695
    %v185 = vpow.pop %v184
    %v186 = vmul.f32 %v183, 1.442695
    %v187 = vpow.pop %v186
    %190 = vset.pattern.permute.xlu0 0
    %191 = vperm.xlu0 %190, %v185
    %v192 = vpop.permute.xlu0 %191
    %193 = vset.pattern.permute.xlu0 0
    %194 = vperm.xlu0 %193, %v187
    %v195 = vpop.permute.xlu0 %194
    %v196 = vlaneseq
    %v197 = vshrl.u32 %v196, 7
    %v198 = vsub.s32 %v155, %v197
    %v199 = vrot.slane %v192, %v198
    %v200 = vlaneseq
    %v201 = vshrl.u32 %v200, 7
    %v202 = vsub.s32 %v155, %v201
    %v203 = vrot.slane %v195, %v202
    %v204 = vsel %vm164, %v203, %v199
    %v206 = vsel %vm167, %v204, 0.0
    %207 = vadd.xlane.f32.xlu0 %v206
    %v208 = vpop.xlane.xlu0 %207
    %v209 = vrcp.pop %v208
    %v211 = vlaneseq
    %v212 = vshrl.u32 %v211, 7
    %v213 = vsub.s32 0, %v212
    %v214 = vrot.slane %v209, %v213
    %v215 = vlaneseq
    %v216 = vshrl.u32 %v215, 7
    %v217 = vsub.s32 1, %v216
    %v218 = vrot.slane %v209, %v217
    %v221 = vmul.f32 %v185, %v214
    %v222 = vmul.f32 %v187, %v218
    %224 = vset.pattern.permute.xlu0 0
    %225 = vperm.xlu0 %224, %v221
    %v226 = vpop.permute.xlu0 %225
    %229 = vset.pattern.permute.xlu0 0
    %230 = vperm.xlu0 %229, %v222
    %v231 = vpop.permute.xlu0 %230
    %v233 = vmul.f32 %v226, %v117
    %v234 = vmul.f32 %v231, %v118
    %vm235 = vcmask 1048320
    %v236 = vsel %vm235, %v233, 0.0
    %v237 = vrot.slane %v236, 4
    %v238 = vadd.f32 %v236, %v237
    %v239 = vrot.slane %v238, 2
    %v240 = vadd.f32 %v238, %v239
    %v241 = vrot.slane %v240, 1
    %v242 = vadd.f32 %v240, %v241
    %v243 = vsel %vm235, %v234, 0.0
    %v244 = vrot.slane %v243, 4
    %v245 = vadd.f32 %v243, %v244
    %v246 = vrot.slane %v245, 2
    %v247 = vadd.f32 %v245, %v246
    %v248 = vrot.slane %v247, 1
    %v249 = vadd.f32 %v247, %v248
    %v250 = vld [vmem:[#allocation6 + $0x8] sm:$0xff]
    %v251 = vld [vmem:[#allocation6 + $0x10] sm:$0xf]
    %254 = vrot.lane.b32.xlu0 %v242, 32
    %v255 = vpop.permute.xlu0 %254
    %256 = vrot.lane.b32.xlu0 %v249, 32
    %v257 = vpop.permute.xlu0 %256
    %v260 = vadd.f32 %v117, %v255
    %v261 = vadd.f32 %v118, %v257
    %v262 = vlaneseq
    %v263 = vshrl.u32 %v262, 7
    %v264 = vsub.s32 0, %v263
    %v265 = vrot.slane %v250, %v264
    %v266 = vadd.f32 %v260, %v265
    %v267 = vadd.f32 %v261, %v265
    %v270 = vrot.slane %v267, 7
    %vm273 = vcmask 261127
    %v274 = vsel %vm273, %v266, 0.0
    %275 = vadd.xlane.f32.xlu0 %v274
    %v276 = vpop.xlane.xlu0 %275
    %vm277 = vcmask 253952
    %v278 = vsel %vm277, %v270, 0.0
    %279 = vadd.xlane.f32.xlu0 %v278
    %v280 = vpop.xlane.xlu0 %279
    %v281 = vrcp.pop 32.0
    %v282 = vmul.f32 %v276, %v281
    %v283 = vmul.f32 %v280, %v281
    %v286 = vrot.slane %v283, 1
    %v289 = vsub.f32 %v266, %v282
    %v290 = vsub.f32 %v267, %v286
    %v291 = vmul.f32 %v289, %v289
    %v292 = vmul.f32 %v290, %v290
    %v295 = vrot.slane %v292, 7
    %v298 = vsel %vm273, %v291, 0.0
    %299 = vadd.xlane.f32.xlu0 %v298
    %v300 = vpop.xlane.xlu0 %299
    %v301 = vsel %vm277, %v295, 0.0
    %302 = vadd.xlane.f32.xlu0 %v301
    %v303 = vpop.xlane.xlu0 %302
    %v304 = vmul.f32 %v300, %v281
    %v305 = vmul.f32 %v303, %v281
    %v306 = vadd.f32 %v304, 1e-05
    %v307 = vadd.f32 %v305, 1e-05
    %v308 = vrsqrt.pop %v306
    %v309 = vrsqrt.pop %v307
    %v312 = vrot.slane %v309, 1
    %v315 = vmul.f32 %v289, %v308
    %v316 = vmul.f32 %v290, %v312
    %v317 = vlaneseq
    %v318 = vshrl.u32 %v317, 7
    %v319 = vsub.s32 1, %v318
    %v320 = vrot.slane %v250, %v319
    %v321 = vmul.f32 %v315, %v320
    %v322 = vmul.f32 %v316, %v320
    %v323 = vlaneseq
    %v324 = vshrl.u32 %v323, 7
    %v325 = vsub.s32 2, %v324
    %v326 = vrot.slane %v250, %v325
    %v327 = vadd.f32 %v321, %v326
    %v328 = vadd.f32 %v322, %v326
    %v329 = vld [vmem:[#allocation4 + $0x8] sm:$0xf]
    %v330 = vld [vmem:[#allocation4 + $0xc] sm:$0xf]
    %v331 = vld [vmem:[#allocation4 + $0x10] sm:$0xf]
    %v332 = vld [vmem:[#allocation4 + $0x14] sm:$0xf]
    %v333 = vld [vmem:[#allocation4 + $0x18] sm:$0xf]
    %v334 = vld [vmem:[#allocation4 + $0x1c] sm:$0xf]
    %v335 = vld [vmem:[#allocation4 + $0x20] sm:$0xf]
    %v336 = vld [vmem:[#allocation4 + $0x24] sm:$0xf]
    %v337 = vld [vmem:[#allocation4 + $0x28] sm:$0xf]
    %v338 = vld [vmem:[#allocation4 + $0x2c] sm:$0xf]
    %v339 = vld [vmem:[#allocation4 + $0x30] sm:$0xf]
    %v340 = vld [vmem:[#allocation4 + $0x34] sm:$0xf]
    %v341 = vpack.c.bf16 %v327, %v327
    %v342 = vpack.c.bf16 %v328, %v328
    %v343 = vlaneseq
    %v344 = vshrl.u32 %v343, 7
    %v345 = vsub.s32 3, %v344
    %v346 = vrot.slane %v250, %v345
    %v349 = vunpack.c.l.b16 %v341
    %v350 = vunpack.c.l.b16 %v342
    %v351 = vrot.slane %v349, 7
    %v352 = vrot.slane %v350, 6
    %v353 = vsel %vm164, %v352, %v351
    %v354 = vpack.c.b16 %v353, %v353
    %v359 = vunpack.c.l.b16 %v329
    %v360 = vunpack.c.l.b16 %v330
    %v361 = vunpack.c.l.b16 %v331
    %v362 = vunpack.c.l.b16 %v332
    %v363 = vpack.c.b16 %v360, %v359
    %v364 = vpack.c.b16 %v362, %v361
    %v368 = vsel %vm145, %v354, 0
    %370 = vmatprep.subr.bf16.mxu0 0
    %371 = vmatpush1.bf16.msra.mxu0 0
    %372 = vmatprep.subr.bf16.mxu0 0
    %373 = vmatpush1.bf16.msra.mxu0 0
    %374 = vmatprep.subr.bf16.mxu0 0
    %375 = vmatpush1.bf16.msra.mxu0 0
    %376 = vmatprep.subr.bf16.mxu0 0
    %377 = vmatpush1.bf16.msra.mxu0 0
    %378 = vmatprep.subr.bf16.mxu0 0
    %379 = vmatpush1.bf16.msra.mxu0 0
    %380 = vmatprep.subr.bf16.mxu0 0
    %381 = vmatpush1.bf16.msra.mxu0 0
    %382 = vmatprep.subr.bf16.mxu0 0
    %383 = vmatpush1.bf16.msra.mxu0 %v364
    %384 = vmatprep.subr.bf16.mxu0 0
    %385 = vmatpush1.bf16.msra.mxu0 %v363
    %386 = vmatprep.subr.bf16.mxu0 0
    %387 = vmatpush2.bf16.msra.mxu0 0
    %388 = vmatprep.subr.bf16.mxu0 0
    %389 = vmatpush2.bf16.msra.mxu0 0
    %390 = vmatprep.subr.bf16.mxu0 0
    %391 = vmatpush2.bf16.msra.mxu0 0
    %392 = vmatprep.subr.bf16.mxu0 0
    %393 = vmatpush2.bf16.msra.mxu0 0
    %394 = vmatprep.subr.bf16.mxu0 0
    %395 = vmatpush2.bf16.msra.mxu0 0
    %396 = vmatprep.subr.bf16.mxu0 0
    %397 = vmatpush2.bf16.msra.mxu0 0
    %398 = vmatprep.subr.bf16.mxu0 0
    %399 = vmatpush2.bf16.msra.mxu0 0
    %400 = vmatprep.subr.bf16.mxu0 0
    %401 = vmatpush2.bf16.msra.mxu0 0
    %402 = vmatprep.mubr.bf16.mxu0 0
    %403 = vmatmul.mubr.bf16.gmra.mxu0 %v368
    %v404 = vpop.f32.mrf.mxu0
    %v405 = vadd.f32 %v346, %v404
    %v406 = vpop.f32.mrf.mxu0
    %v407 = vpop.f32.mrf.mxu0
    %v408 = vpop.f32.mrf.mxu0
    %409 = vdwg.mxu0
    %v410 = vmax.f32 %v405, 0.0
    %v411 = vpack.c.bf16 %v410, %v410
    %v412 = vlaneseq
    %v413 = vshrl.u32 %v412, 7
    %v414 = vsub.s32 4, %v413
    %v415 = vrot.slane %v250, %v414
    %v424 = vunpack.c.l.b16 %v333
    %v425 = vunpack.c.l.b16 %v334
    %v426 = vunpack.c.l.b16 %v335
    %v427 = vunpack.c.l.b16 %v336
    %v428 = vunpack.c.l.b16 %v337
    %v429 = vunpack.c.l.b16 %v338
    %v430 = vunpack.c.l.b16 %v339
    %v431 = vunpack.c.l.b16 %v340
    %v432 = vpack.c.b16 %v425, %v424
    %v433 = vpack.c.b16 %v427, %v426
    %v434 = vpack.c.b16 %v429, %v428
    %v435 = vpack.c.b16 %v431, %v430
    %vm440 = vcmask 523264
    %v442 = vsel %vm440, %v411, 0
    %444 = vmatprep.subr.bf16.mxu0 0
    %445 = vmatpush1.bf16.msra.mxu0 0
    %446 = vmatprep.subr.bf16.mxu0 0
    %447 = vmatpush1.bf16.msra.mxu0 0
    %448 = vmatprep.subr.bf16.mxu0 0
    %449 = vmatpush1.bf16.msra.mxu0 0
    %450 = vmatprep.subr.bf16.mxu0 0
    %451 = vmatpush1.bf16.msra.mxu0 0
    %452 = vmatprep.subr.bf16.mxu0 0
    %453 = vmatpush1.bf16.msra.mxu0 %v435
    %454 = vmatprep.subr.bf16.mxu0 0
    %455 = vmatpush1.bf16.msra.mxu0 %v434
    %456 = vmatprep.subr.bf16.mxu0 0
    %457 = vmatpush1.bf16.msra.mxu0 %v433
    %458 = vmatprep.subr.bf16.mxu0 0
    %459 = vmatpush1.bf16.msra.mxu0 %v432
    %460 = vmatprep.subr.bf16.mxu0 0
    %461 = vmatpush2.bf16.msra.mxu0 0
    %462 = vmatprep.subr.bf16.mxu0 0
    %463 = vmatpush2.bf16.msra.mxu0 0
    %464 = vmatprep.subr.bf16.mxu0 0
    %465 = vmatpush2.bf16.msra.mxu0 0
    %466 = vmatprep.subr.bf16.mxu0 0
    %467 = vmatpush2.bf16.msra.mxu0 0
    %468 = vmatprep.subr.bf16.mxu0 0
    %469 = vmatpush2.bf16.msra.mxu0 0
    %470 = vmatprep.subr.bf16.mxu0 0
    %471 = vmatpush2.bf16.msra.mxu0 0
    %472 = vmatprep.subr.bf16.mxu0 0
    %473 = vmatpush2.bf16.msra.mxu0 0
    %474 = vmatprep.subr.bf16.mxu0 0
    %475 = vmatpush2.bf16.msra.mxu0 0
    %476 = vmatprep.mubr.bf16.mxu0 0
    %477 = vmatmul.mubr.bf16.gmra.mxu0 %v442
    %v478 = vpop.f32.mrf.mxu0
    %v479 = vadd.f32 %v415, %v478
    %v480 = vpop.f32.mrf.mxu0
    %v481 = vpop.f32.mrf.mxu0
    %v482 = vpop.f32.mrf.mxu0
    %483 = vdwg.mxu0
    %v485 = vrot.slane %v479, 1
    %v486 = vrot.slane %v479, 2
    %v489 = vadd.f32 %v327, %v485
    %v490 = vadd.f32 %v328, %v486
    %v493 = vrot.slane %v490, 7
    %v496 = vsel %vm273, %v489, 0.0
    %497 = vadd.xlane.f32.xlu0 %v496
    %v498 = vpop.xlane.xlu0 %497
    %v499 = vsel %vm277, %v493, 0.0
    %500 = vadd.xlane.f32.xlu0 %v499
    %v501 = vpop.xlane.xlu0 %500
    %v502 = vmul.f32 %v498, %v281
    %v503 = vmul.f32 %v501, %v281
    %v506 = vrot.slane %v503, 1
    %v509 = vsub.f32 %v489, %v502
    %v510 = vsub.f32 %v490, %v506
    %v511 = vmul.f32 %v509, %v509
    %v512 = vmul.f32 %v510, %v510
    %v515 = vrot.slane %v512, 7
    %v518 = vsel %vm273, %v511, 0.0
    %519 = vadd.xlane.f32.xlu0 %v518
    %v520 = vpop.xlane.xlu0 %519
    %v521 = vsel %vm277, %v515, 0.0
    %522 = vadd.xlane.f32.xlu0 %v521
    %v523 = vpop.xlane.xlu0 %522
    %v524 = vmul.f32 %v520, %v281
    %v525 = vmul.f32 %v523, %v281
    %v526 = vadd.f32 %v524, 1e-05
    %v527 = vadd.f32 %v525, 1e-05
    %v528 = vrsqrt.pop %v526
    %v529 = vrsqrt.pop %v527
    %v532 = vrot.slane %v529, 1
    %v535 = vmul.f32 %v509, %v528
    %v536 = vmul.f32 %v510, %v532
    %v537 = vlaneseq
    %v538 = vshrl.u32 %v537, 7
    %v539 = vsub.s32 5, %v538
    %v540 = vrot.slane %v250, %v539
    %v541 = vmul.f32 %v535, %v540
    %v542 = vmul.f32 %v536, %v540
    %v543 = vlaneseq
    %v544 = vshrl.u32 %v543, 7
    %v545 = vsub.s32 6, %v544
    %v546 = vrot.slane %v250, %v545
    %v547 = vadd.f32 %v541, %v546
    %v548 = vadd.f32 %v542, %v546
    %v549 = vpack.c.bf16 %v547, %v547
    %v550 = vpack.c.bf16 %v548, %v548
    %v551 = vlaneseq
    %v552 = vshrl.u32 %v551, 7
    %v553 = vsub.s32 7, %v552
    %v554 = vrot.slane %v250, %v553
    %v557 = vunpack.c.l.b16 %v549
    %v558 = vunpack.c.l.b16 %v550
    %v559 = vrot.slane %v557, 7
    %v560 = vrot.slane %v558, 6
    %v561 = vsel %vm164, %v560, %v559
    %v562 = vpack.c.b16 %v561, %v561
    %563 = vrot.lane.b32.xlu0 %v363, 64
    %v564 = vpop.permute.xlu0 %563
    %565 = vrot.lane.b32.xlu0 %v364, 64
    %v566 = vpop.permute.xlu0 %565
    %v570 = vsel %vm145, %v562, 0
    %572 = vmatprep.subr.bf16.mxu0 0
    %573 = vmatpush1.bf16.msra.mxu0 0
    %574 = vmatprep.subr.bf16.mxu0 0
    %575 = vmatpush1.bf16.msra.mxu0 0
    %576 = vmatprep.subr.bf16.mxu0 0
    %577 = vmatpush1.bf16.msra.mxu0 0
    %578 = vmatprep.subr.bf16.mxu0 0
    %579 = vmatpush1.bf16.msra.mxu0 0
    %580 = vmatprep.subr.bf16.mxu0 0
    %581 = vmatpush1.bf16.msra.mxu0 0
    %582 = vmatprep.subr.bf16.mxu0 0
    %583 = vmatpush1.bf16.msra.mxu0 0
    %584 = vmatprep.subr.bf16.mxu0 0
    %585 = vmatpush1.bf16.msra.mxu0 %v566
    %586 = vmatprep.subr.bf16.mxu0 0
    %587 = vmatpush1.bf16.msra.mxu0 %v564
    %588 = vmatprep.subr.bf16.mxu0 0
    %589 = vmatpush2.bf16.msra.mxu0 0
    %590 = vmatprep.subr.bf16.mxu0 0
    %591 = vmatpush2.bf16.msra.mxu0 0
    %592 = vmatprep.subr.bf16.mxu0 0
    %593 = vmatpush2.bf16.msra.mxu0 0
    %594 = vmatprep.subr.bf16.mxu0 0
    %595 = vmatpush2.bf16.msra.mxu0 0
    %596 = vmatprep.subr.bf16.mxu0 0
    %597 = vmatpush2.bf16.msra.mxu0 0
    %598 = vmatprep.subr.bf16.mxu0 0
    %599 = vmatpush2.bf16.msra.mxu0 0
    %600 = vmatprep.subr.bf16.mxu0 0
    %601 = vmatpush2.bf16.msra.mxu0 0
    %602 = vmatprep.subr.bf16.mxu0 0
    %603 = vmatpush2.bf16.msra.mxu0 0
    %604 = vmatprep.mubr.bf16.mxu0 0
    %605 = vmatmul.mubr.bf16.gmra.mxu0 %v570
    %v606 = vpop.f32.mrf.mxu0
    %v607 = vadd.f32 %v554, %v606
    %v608 = vpop.f32.mrf.mxu0
    %v609 = vpop.f32.mrf.mxu0
    %v610 = vpop.f32.mrf.mxu0
    %611 = vdwg.mxu0
    %v612 = vmax.f32 %v607, 0.0
    %vm613 = vcmask 254976
    %v614 = vsel %vm613, %v612, 0.0
    %615 = vadd.xlane.f32.xlu0 %v614
    %v616 = vpop.xlane.xlu0 %615
    %v617 = vmul.f32 %v616, %v281
    %v618 = vsub.f32 %v612, %v617
    %v619 = vmul.f32 %v618, %v618
    %v620 = vsel %vm613, %v619, 0.0
    %621 = vadd.xlane.f32.xlu0 %v620
    %v622 = vpop.xlane.xlu0 %621
    %v623 = vmul.f32 %v622, %v281
    %v624 = vadd.f32 %v623, 1e-05
    %v625 = vrsqrt.pop %v624
    %v626 = vmul.f32 %v618, %v625
    %v627 = vlaneseq
    %v628 = vshrl.u32 %v627, 7
    %v629 = vsub.s32 0, %v628
    %v630 = vrot.slane %v251, %v629
    %v631 = vmul.f32 %v626, %v630
    %v632 = vlaneseq
    %v633 = vshrl.u32 %v632, 7
    %v634 = vsub.s32 1, %v633
    %v635 = vrot.slane %v251, %v634
    %v636 = vadd.f32 %v631, %v635
    %v637 = vlaneseq
    %v638 = vshrl.u32 %v637, 7
    %v639 = vsub.s32 2, %v638
    %v640 = vrot.slane %v251, %v639
    %v641 = vmul.f32 %v636, %v640
    %v642 = vsel %vm613, %v641, 0.0
    %643 = vadd.xlane.f32.xlu0 %v642
    %v644 = vpop.xlane.xlu0 %643
    %v645 = vlaneseq
    %v646 = vshrl.u32 %v645, 7
    %v647 = vsub.s32 3, %v646
    %v648 = vrot.slane %v251, %v647
    %v649 = vadd.f32 %v644, %v648
    %vm650 = vcmask 1024
    %651 = vst.msk [vmem:[%s3] sm:$0x3] %vm650, %v649
    // Predicated region
    $region26: #{tpu_custom_call.1} parent=1 // pred_check
      _
    $region27: #{tpu_custom_call.1} parent=1 // pred_check_branch
      %653 = sbr.rel (0) target = $region29
    $region28: #{tpu_custom_call.1} parent=1 // pred_region
      _
    $region29: #{tpu_custom_call.1} parent=1 // pred_fallthru
      _
    // Predicated region
    $region30: #{tpu_custom_call.1} parent=1 // pred_check
      _
    $region31: #{tpu_custom_call.1} parent=1 // pred_check_branch
      %655 = sbr.rel (0) target = $region33
    $region32: #{tpu_custom_call.1} parent=1 // pred_region
      _
    $region33: #{tpu_custom_call.1} parent=1 // pred_fallthru
      _
    %656 = vsyncpa [#allocation3], 1
    %657 = vsyncpa [#allocation5], 1

</llo_original>
